<compile_context>
chip_gen: v6e
topology: v6e:2x2x1
jax: 0.10.0
libtpu: 0.0.40
codegen_flags: <defaults>
</compile_context>

<pallas_src>
import functools

import numpy as np
import jax
import jax.numpy as jnp
from jax.experimental import pallas as pl
from jax.experimental.pallas import tpu as pltpu


# ---------------------------------------------------------------------------
# Fused kernel
# ---------------------------------------------------------------------------
def basic_block_kernel(x_ref, w1_ref, b1_ref, w2_ref, b2_ref, mask_ref,
                       out_ref, *, W, L):
    """out = relu(bn2(conv2(relu(bn1(conv1(x))))) + x), one batch-chunk.

    x_ref:    (C, L)       activations, batch folded onto the lane axis
    w*_ref:   (C, 9*C)     3x3 taps, BN scale pre-folded, tap-major columns
    b*_ref:   (C, 1)       folded BN bias
    mask_ref: (9*C, L)     precomputed 0/1 "same"-padding validity mask
    """
    x = x_ref[...]                                   # (C, L) f32
    mask = mask_ref[...]                             # (9*C, L) f32, loaded once

    # Static lane offsets of the 9 taps (tap t = kh*3 + kw, dh=kh-1, dw=kw-1).
    offs = [(kh - 1) * W + (kw - 1) for kh in range(3) for kw in range(3)]

    def conv3x3(src, w_ref):
        # shifted_t[:, p] == src[:, p + d_t]; lanes that wrapped (image border
        # or cross-image) are zeroed by the precomputed mask -> this IS the
        # zero padding.  One stacked operand, ONE MXU matmul per conv.
        rolled = [src if d == 0 else pltpu.roll(src, shift=(-d) % L, axis=1)
                  for d in offs]
        stacked = jnp.concatenate(rolled, axis=0) * mask       # (9*C, L)
        return jnp.dot(w_ref[...], stacked,
                       preferred_element_type=jnp.float32)     # (C, L)

    # conv1 + bn1 (scale folded into w1) + relu  -- stays in VMEM/vregs.
    h1 = jnp.maximum(conv3x3(x, w1_ref) + b1_ref[...], 0.0)
    # conv2 + bn2 + residual + relu
    y = conv3x3(h1, w2_ref) + b2_ref[...] + x
    out_ref[...] = jnp.maximum(y, 0.0).astype(out_ref.dtype)


# ---------------------------------------------------------------------------
# Host-side constant: per-tap "same"-padding validity mask, replicated per
# input channel and tiled over the images folded onto the lane axis.
# ---------------------------------------------------------------------------
def _build_tap_mask(H, W, images_per_step, C):
    HW = H * W
    q = np.arange(images_per_step * HW)
    p = q % HW                       # position within the image
    hh, ww = p // W, p % W
    rows = []
    for kh in range(3):
        for kw in range(3):
            dh, dw = kh - 1, kw - 1
            valid = ((hh + dh >= 0) & (hh + dh < H) &
                     (ww + dw >= 0) & (ww + dw < W)).astype(np.float32)
            rows.append(np.repeat(valid[None, :], C, axis=0))
    return np.concatenate(rows, axis=0)              # (9*C, images_per_step*HW)


# ---------------------------------------------------------------------------
# pallas_call wrapper
# ---------------------------------------------------------------------------
def basic_block_forward(x_nchw, params):
    """BasicBlock forward (stride=1, downsample=None). x_nchw: (N, C, H, W) f32."""
    N, C, H, W = x_nchw.shape
    HW = H * W
    Cout = params["w1"].shape[0]
    assert params["w1"].shape == (Cout, 9 * C) and Cout == C, \
        "downsample=None requires inplanes == planes"

    # Grid coarsening: whole batch on lanes; split into 2 parallel steps only
    # when the batch is big enough (keeps both v7x TensorCores busy for N>=4,
    # avoids per-step pipeline overhead at small N on v5e/v6e).
    G = 2 if (N >= 4 and N % 2 == 0) else 1
    L = (N // G) * HW

    # Layout plumbing (tiny XLA ops): (N, C, H, W) -> (C, N*HW), lane-dense.
    x = jnp.transpose(x_nchw.reshape(N, C, HW), (1, 0, 2)).reshape(C, N * HW)

    mask = jnp.asarray(_build_tap_mask(H, W, N // G, C))        # (9*C, L) const

    kernel = functools.partial(basic_block_kernel, W=W, L=L)

    out = pl.pallas_call(
        kernel,
        out_shape=jax.ShapeDtypeStruct((Cout, N * HW), jnp.float32),
        grid=(G,),
        in_specs=[
            pl.BlockSpec((C, L), lambda g: (0, g)),            # activations
            pl.BlockSpec((Cout, 9 * C), lambda g: (0, 0)),     # w1 (resident)
            pl.BlockSpec((Cout, 1), lambda g: (0, 0)),         # bias1
            pl.BlockSpec((Cout, 9 * Cout), lambda g: (0, 0)),  # w2 (resident)
            pl.BlockSpec((Cout, 1), lambda g: (0, 0)),         # bias2
            pl.BlockSpec((9 * C, L), lambda g: (0, 0)),        # padding mask
        ],
        out_specs=pl.BlockSpec((Cout, L), lambda g: (0, g)),
        compiler_params=pltpu.CompilerParams(dimension_semantics=("parallel",)),
    )(x, params["w1"], params["bias1"], params["w2"], params["bias2"], mask)

    # (Cout, N*HW) -> (N, Cout, H, W)
    return jnp.transpose(out.reshape(Cout, N, HW), (1, 0, 2)).reshape(N, Cout, H, W)


# ---------------------------------------------------------------------------
# Deterministic parameter init (synthetic; mirrors the module's shapes)
# ---------------------------------------------------------------------------
def init_params(key, inplanes, planes, eps=1e-5):
    ks = jax.random.split(key, 10)

    w1_oihw = jax.random.normal(ks[0], (planes, inplanes, 3, 3), jnp.float32) * 0.1
    w2_oihw = jax.random.normal(ks[1], (planes, planes, 3, 3), jnp.float32) * 0.1

    def bn(kg, kb, km, kv, c):
        gamma = jax.random.uniform(kg, (c,), jnp.float32, 0.5, 1.5)
        beta = jax.random.normal(kb, (c,), jnp.float32) * 0.1
        mean = jax.random.normal(km, (c,), jnp.float32) * 0.1
        var = jax.random.uniform(kv, (c,), jnp.float32, 0.5, 1.5)
        scale = gamma / jnp.sqrt(var + eps)
        bias = beta - mean * scale
        return scale, bias

    s1, b1 = bn(ks[2], ks[3], ks[4], ks[5], planes)
    s2, b2 = bn(ks[6], ks[7], ks[8], ks[9], planes)

    def fold(w_oihw, scale):
        # (Cout, Cin, 3, 3) -> (Cout, 9*Cin), tap-major columns (t = kh*3+kw),
        # BN scale folded into the weights.  Matches the kernel's stacking.
        cout, cin = w_oihw.shape[0], w_oihw.shape[1]
        w = jnp.transpose(w_oihw, (0, 2, 3, 1)).reshape(cout, 9 * cin)
        return w * scale[:, None]

    pallas_params = dict(
        w1=fold(w1_oihw, s1), bias1=b1[:, None],
        w2=fold(w2_oihw, s2), bias2=b2[:, None],
    )
    ref_params = dict(w1=w1_oihw, w2=w2_oihw,
                      scale1=s1, bias1=b1, scale2=s2, bias2=b2)
    return pallas_params, ref_params


def ref_forward(x, tp):
    """Pure-JAX (XLA conv) reference of the same BasicBlock forward, in NCHW."""
    def conv(inp, w):
        return jax.lax.conv_general_dilated(
            inp, w, window_strides=(1, 1), padding=((1, 1), (1, 1)),
            dimension_numbers=("NCHW", "OIHW", "NCHW"))

    b = lambda v: v[None, :, None, None]
    out = conv(x, tp["w1"]) * b(tp["scale1"]) + b(tp["bias1"])
    out = jnp.maximum(out, 0.0)
    out = conv(out, tp["w2"]) * b(tp["scale2"]) + b(tp["bias2"])
    out = out + x
    return jnp.maximum(out, 0.0)


# ---------------------------------------------------------------------------
if __name__ == "__main__":
    key = jax.random.PRNGKey(0)
    kx, kp = jax.random.split(key)

    N, C, H, W = 2, 4, 16, 16          # inplanes = planes = 4 (expansion = 1)
    x = jax.random.normal(kx, (N, C, H, W), jnp.float32)
    params, ref_params = init_params(kp, C, C)

    out = jax.jit(basic_block_forward)(x, params)
    out = jax.block_until_ready(out)

    ref = ref_forward(x, ref_params)
    assert out.shape == (N, C, H, W), out.shape
    max_err = float(jnp.max(jnp.abs(out - ref)))
    if not jnp.allclose(out, ref, atol=1e-3, rtol=1e-3):
        raise AssertionError(f"Pallas BasicBlock mismatch vs reference, max_err={max_err}")
    print("KERNEL_OK")
</pallas_src>

<mosaic_0001>
module attributes {stable_mosaic.version = 11 : i64} {
  func.func @basic_block_kernel(%arg0: i32, %arg1: memref<4x512xf32, #tpu.memory_space<vmem>>, %arg2: memref<4x36xf32, #tpu.memory_space<vmem>>, %arg3: memref<4x1xf32, #tpu.memory_space<vmem>>, %arg4: memref<4x36xf32, #tpu.memory_space<vmem>>, %arg5: memref<4x1xf32, #tpu.memory_space<vmem>>, %arg6: memref<36x512xf32, #tpu.memory_space<vmem>>, %arg7: memref<4x512xf32, #tpu.memory_space<vmem>>) attributes {dimension_semantics = [#tpu.dimension_semantics<parallel>], iteration_bounds = array<i64: 1>, scalar_prefetch = 0 : i64, scratch_operands = 0 : i64, tpu.core_type = #tpu.core_type<tc>, window_params = [{transform_indices = @transform_0, window_bounds = array<i64: 4, 512>}, {pipeline_mode = #tpu.pipeline_mode<synchronous>, transform_indices = @transform_1, window_bounds = array<i64: 4, 36>}, {pipeline_mode = #tpu.pipeline_mode<synchronous>, transform_indices = @transform_2, window_bounds = array<i64: 4, 1>}, {pipeline_mode = #tpu.pipeline_mode<synchronous>, transform_indices = @transform_3, window_bounds = array<i64: 4, 36>}, {pipeline_mode = #tpu.pipeline_mode<synchronous>, transform_indices = @transform_4, window_bounds = array<i64: 4, 1>}, {pipeline_mode = #tpu.pipeline_mode<synchronous>, transform_indices = @transform_5, window_bounds = array<i64: 36, 512>}, {transform_indices = @transform_6, window_bounds = array<i64: 4, 512>}]} {
    %c0 = arith.constant 0 : index
    %c0_0 = arith.constant 0 : index
    %0 = vector.load %arg1[%c0, %c0_0] : memref<4x512xf32, #tpu.memory_space<vmem>>, vector<4x512xf32>
    %c0_1 = arith.constant 0 : index
    %c0_2 = arith.constant 0 : index
    %1 = vector.load %arg6[%c0_1, %c0_2] : memref<36x512xf32, #tpu.memory_space<vmem>>, vector<36x512xf32>
    %c17_i32 = arith.constant 17 : i32
    %2 = tpu.dynamic_rotate %0 by %c17_i32 dim 1 : vector<4x512xf32>, i32 -> vector<4x512xf32>
    %c16_i32 = arith.constant 16 : i32
    %3 = tpu.dynamic_rotate %0 by %c16_i32 dim 1 : vector<4x512xf32>, i32 -> vector<4x512xf32>
    %c15_i32 = arith.constant 15 : i32
    %4 = tpu.dynamic_rotate %0 by %c15_i32 dim 1 : vector<4x512xf32>, i32 -> vector<4x512xf32>
    %c1_i32 = arith.constant 1 : i32
    %5 = tpu.dynamic_rotate %0 by %c1_i32 dim 1 : vector<4x512xf32>, i32 -> vector<4x512xf32>
    %c511_i32 = arith.constant 511 : i32
    %6 = tpu.dynamic_rotate %0 by %c511_i32 dim 1 : vector<4x512xf32>, i32 -> vector<4x512xf32>
    %c497_i32 = arith.constant 497 : i32
    %7 = tpu.dynamic_rotate %0 by %c497_i32 dim 1 : vector<4x512xf32>, i32 -> vector<4x512xf32>
    %c496_i32 = arith.constant 496 : i32
    %8 = tpu.dynamic_rotate %0 by %c496_i32 dim 1 : vector<4x512xf32>, i32 -> vector<4x512xf32>
    %c495_i32 = arith.constant 495 : i32
    %9 = tpu.dynamic_rotate %0 by %c495_i32 dim 1 : vector<4x512xf32>, i32 -> vector<4x512xf32>
    %10 = tpu.concatenate %2, %3, %4, %5, %0, %6, %7, %8, %9 in 0 : vector<4x512xf32>, vector<4x512xf32>, vector<4x512xf32>, vector<4x512xf32>, vector<4x512xf32>, vector<4x512xf32>, vector<4x512xf32>, vector<4x512xf32>, vector<4x512xf32> -> vector<36x512xf32>
    %11 = arith.mulf %10, %1 : vector<36x512xf32>
    %c0_3 = arith.constant 0 : index
    %c0_4 = arith.constant 0 : index
    %12 = vector.load %arg2[%c0_3, %c0_4] : memref<4x36xf32, #tpu.memory_space<vmem>>, vector<4x36xf32>
    %cst = arith.constant dense<0.000000e+00> : vector<4x512xf32>
    %13 = tpu.matmul %12, %11, %cst {dimension_numbers = #tpu.dot_dimension_numbers<[1], [0], [0], [1], [0, 0, 1, 1], [], []>} : vector<4x36xf32>, vector<36x512xf32>, vector<4x512xf32> -> vector<4x512xf32>
    %c0_5 = arith.constant 0 : index
    %c0_6 = arith.constant 0 : index
    %14 = vector.load %arg3[%c0_5, %c0_6] : memref<4x1xf32, #tpu.memory_space<vmem>>, vector<4x1xf32>
    %15 = vector.broadcast %14 : vector<4x1xf32> to vector<4x512xf32>
    %16 = arith.addf %13, %15 : vector<4x512xf32>
    %cst_7 = arith.constant 0.000000e+00 : f32
    %17 = vector.broadcast %cst_7 : f32 to vector<4x512xf32>
    %18 = arith.maximumf %16, %17 : vector<4x512xf32>
    %c17_i32_8 = arith.constant 17 : i32
    %19 = tpu.dynamic_rotate %18 by %c17_i32_8 dim 1 : vector<4x512xf32>, i32 -> vector<4x512xf32>
    %c16_i32_9 = arith.constant 16 : i32
    %20 = tpu.dynamic_rotate %18 by %c16_i32_9 dim 1 : vector<4x512xf32>, i32 -> vector<4x512xf32>
    %c15_i32_10 = arith.constant 15 : i32
    %21 = tpu.dynamic_rotate %18 by %c15_i32_10 dim 1 : vector<4x512xf32>, i32 -> vector<4x512xf32>
    %c1_i32_11 = arith.constant 1 : i32
    %22 = tpu.dynamic_rotate %18 by %c1_i32_11 dim 1 : vector<4x512xf32>, i32 -> vector<4x512xf32>
    %c511_i32_12 = arith.constant 511 : i32
    %23 = tpu.dynamic_rotate %18 by %c511_i32_12 dim 1 : vector<4x512xf32>, i32 -> vector<4x512xf32>
    %c497_i32_13 = arith.constant 497 : i32
    %24 = tpu.dynamic_rotate %18 by %c497_i32_13 dim 1 : vector<4x512xf32>, i32 -> vector<4x512xf32>
    %c496_i32_14 = arith.constant 496 : i32
    %25 = tpu.dynamic_rotate %18 by %c496_i32_14 dim 1 : vector<4x512xf32>, i32 -> vector<4x512xf32>
    %c495_i32_15 = arith.constant 495 : i32
    %26 = tpu.dynamic_rotate %18 by %c495_i32_15 dim 1 : vector<4x512xf32>, i32 -> vector<4x512xf32>
    %27 = tpu.concatenate %19, %20, %21, %22, %18, %23, %24, %25, %26 in 0 : vector<4x512xf32>, vector<4x512xf32>, vector<4x512xf32>, vector<4x512xf32>, vector<4x512xf32>, vector<4x512xf32>, vector<4x512xf32>, vector<4x512xf32>, vector<4x512xf32> -> vector<36x512xf32>
    %28 = arith.mulf %27, %1 : vector<36x512xf32>
    %c0_16 = arith.constant 0 : index
    %c0_17 = arith.constant 0 : index
    %29 = vector.load %arg4[%c0_16, %c0_17] : memref<4x36xf32, #tpu.memory_space<vmem>>, vector<4x36xf32>
    %cst_18 = arith.constant dense<0.000000e+00> : vector<4x512xf32>
    %30 = tpu.matmul %29, %28, %cst_18 {dimension_numbers = #tpu.dot_dimension_numbers<[1], [0], [0], [1], [0, 0, 1, 1], [], []>} : vector<4x36xf32>, vector<36x512xf32>, vector<4x512xf32> -> vector<4x512xf32>
    %c0_19 = arith.constant 0 : index
    %c0_20 = arith.constant 0 : index
    %31 = vector.load %arg5[%c0_19, %c0_20] : memref<4x1xf32, #tpu.memory_space<vmem>>, vector<4x1xf32>
    %32 = vector.broadcast %31 : vector<4x1xf32> to vector<4x512xf32>
    %33 = arith.addf %30, %32 : vector<4x512xf32>
    %34 = arith.addf %33, %0 : vector<4x512xf32>
    %cst_21 = arith.constant 0.000000e+00 : f32
    %35 = vector.broadcast %cst_21 : f32 to vector<4x512xf32>
    %36 = arith.maximumf %34, %35 : vector<4x512xf32>
    %c0_22 = arith.constant 0 : index
    %c0_23 = arith.constant 0 : index
    %37 = vector.load %arg7[%c0_22, %c0_23] : memref<4x512xf32, #tpu.memory_space<vmem>>, vector<4x512xf32>
    tpu.vector_store %arg7[%c0_22, %c0_23], %36 {strides = array<i32>} : memref<4x512xf32, #tpu.memory_space<vmem>>, vector<4x512xf32>,
    return
  }
  func.func @transform_0(%arg0: i32) -> (i32, i32) {
    %c0_i32 = arith.constant 0 : i32
    %c0_i32_0 = arith.constant 0 : i32
    return %c0_i32, %arg0 : i32, i32
  }
  func.func @transform_1(%arg0: i32) -> (i32, i32) {
    %c0_i32 = arith.constant 0 : i32
    %c0_i32_0 = arith.constant 0 : i32
    %c0_i32_1 = arith.constant 0 : i32
    return %c0_i32, %c0_i32_0 : i32, i32
  }
  func.func @transform_2(%arg0: i32) -> (i32, i32) {
    %c0_i32 = arith.constant 0 : i32
    %c0_i32_0 = arith.constant 0 : i32
    %c0_i32_1 = arith.constant 0 : i32
    return %c0_i32, %c0_i32_0 : i32, i32
  }
  func.func @transform_3(%arg0: i32) -> (i32, i32) {
    %c0_i32 = arith.constant 0 : i32
    %c0_i32_0 = arith.constant 0 : i32
    %c0_i32_1 = arith.constant 0 : i32
    return %c0_i32, %c0_i32_0 : i32, i32
  }
  func.func @transform_4(%arg0: i32) -> (i32, i32) {
    %c0_i32 = arith.constant 0 : i32
    %c0_i32_0 = arith.constant 0 : i32
    %c0_i32_1 = arith.constant 0 : i32
    return %c0_i32, %c0_i32_0 : i32, i32
  }
  func.func @transform_5(%arg0: i32) -> (i32, i32) {
    %c0_i32 = arith.constant 0 : i32
    %c0_i32_0 = arith.constant 0 : i32
    %c0_i32_1 = arith.constant 0 : i32
    return %c0_i32, %c0_i32_0 : i32, i32
  }
  func.func @transform_6(%arg0: i32) -> (i32, i32) {
    %c0_i32 = arith.constant 0 : i32
    %c0_i32_0 = arith.constant 0 : i32
    return %c0_i32, %arg0 : i32, i32
  }
}

</mosaic_0001>

<llo_original>
// kernel: basic_block_forward.1
$region0: #{basic_block_forward.1}
  #allocation0 [shape = 'u32[]', space=smem, size = 0x4, offset = 0x4, fixed_abs, tag = 'smem constant byte address 0x4 - core index']
  #allocation1 [shape = 'u32[144,128]{1,0:T(1,128)}', space=vmem, size = 0x12000, scoped, tag = 'internal scratch']
  %s0 = inlined_call_operand.vmem [shape: f32[4,512], index: 0, kind: input, shape index: {}]
  %s1 = inlined_call_operand.vmem [shape: f32[4,36], index: 1, kind: input, shape index: {}]
  %s2 = inlined_call_operand.vmem [shape: f32[4,1], index: 2, kind: input, shape index: {}]
  %s3 = inlined_call_operand.vmem [shape: f32[4,36], index: 3, kind: input, shape index: {}]
  %s4 = inlined_call_operand.vmem [shape: f32[4,1], index: 4, kind: input, shape index: {}]
  %s5 = inlined_call_operand.vmem [shape: f32[36,512], index: 5, kind: input, shape index: {}]
  %s6 = inlined_call_operand.vmem [shape: f32[4,512], index: 6, kind: output, shape index: {}]
  %s7 = sld [smem:[#allocation0]]
  $region34: #{basic_block_forward.1} parent=0
    _
  %s9 = ssub.s32 1, %s7
  %s10 = scalar_select 0, %s9, %s7
  // Predicated region
  $region2: #{basic_block_forward.1} parent=0 // pred_check
    _
  $region3: #{basic_block_forward.1} parent=0 // pred_check_branch
    %12 = sbr.rel (0) target = $region5
  $region4: #{basic_block_forward.1} parent=0 // pred_region
    _
  $region5: #{basic_block_forward.1} parent=0 // pred_fallthru
    _
  // Predicated region
  $region6: #{basic_block_forward.1} parent=0 // pred_check
    _
  $region7: #{basic_block_forward.1} parent=0 // pred_check_branch
    %14 = sbr.rel (0) target = $region9
  $region8: #{basic_block_forward.1} parent=0 // pred_region
    _
  $region9: #{basic_block_forward.1} parent=0 // pred_fallthru
    _
  // Predicated region
  $region10: #{basic_block_forward.1} parent=0 // pred_check
    _
  $region11: #{basic_block_forward.1} parent=0 // pred_check_branch
    %16 = sbr.rel (0) target = $region13
  $region12: #{basic_block_forward.1} parent=0 // pred_region
    _
  $region13: #{basic_block_forward.1} parent=0 // pred_fallthru
    _
  // Predicated region
  $region14: #{basic_block_forward.1} parent=0 // pred_check
    _
  $region15: #{basic_block_forward.1} parent=0 // pred_check_branch
    %18 = sbr.rel (0) target = $region17
  $region16: #{basic_block_forward.1} parent=0 // pred_region
    _
  $region17: #{basic_block_forward.1} parent=0 // pred_fallthru
    _
  // Predicated region
  $region18: #{basic_block_forward.1} parent=0 // pred_check
    _
  $region19: #{basic_block_forward.1} parent=0 // pred_check_branch
    %20 = sbr.rel (0) target = $region21
  $region20: #{basic_block_forward.1} parent=0 // pred_region
    _
  $region21: #{basic_block_forward.1} parent=0 // pred_fallthru
    _
  // Predicated region
  $region22: #{basic_block_forward.1} parent=0 // pred_check
    _
  $region23: #{basic_block_forward.1} parent=0 // pred_check_branch
    %22 = sbr.rel (0) target = $region25
  $region24: #{basic_block_forward.1} parent=0 // pred_region
    _
  $region25: #{basic_block_forward.1} parent=0 // pred_fallthru
    _
  %v23 = vld [vmem:[%s0] sm:$0xff]
  %v24 = vld [vmem:[%s0 + $0x8] sm:$0xff]
  %v25 = vld [vmem:[%s5] sm:$0xff]
  %v26 = vld [vmem:[%s5 + $0x8] sm:$0xff]
  %v27 = vld [vmem:[%s5 + $0x10] sm:$0xff]
  %v28 = vld [vmem:[%s5 + $0x18] sm:$0xff]
  %v29 = vld [vmem:[%s5 + $0x20] sm:$0xff]
  %v30 = vld [vmem:[%s5 + $0x28] sm:$0xff]
  %v31 = vld [vmem:[%s5 + $0x30] sm:$0xff]
  %v32 = vld [vmem:[%s5 + $0x38] sm:$0xff]
  %v33 = vld [vmem:[%s5 + $0x40] sm:$0xff]
  %v34 = vld [vmem:[%s5 + $0x48] sm:$0xff]
  %v35 = vld [vmem:[%s5 + $0x50] sm:$0xff]
  %v36 = vld [vmem:[%s5 + $0x58] sm:$0xff]
  %v37 = vld [vmem:[%s5 + $0x60] sm:$0xff]
  %v38 = vld [vmem:[%s5 + $0x68] sm:$0xff]
  %v39 = vld [vmem:[%s5 + $0x70] sm:$0xff]
  %v40 = vld [vmem:[%s5 + $0x78] sm:$0xff]
  %v41 = vld [vmem:[%s5 + $0x80] sm:$0xf]
  %v42 = vld [vmem:[%s5 + $0x88] sm:$0xf]
  %v43 = vld [vmem:[%s5 + $0x90] sm:$0xf]
  %v44 = vld [vmem:[%s5 + $0x98] sm:$0xf]
  %v47 = vcombine.high %v23, %v23
  %v48 = vcombine.high %v24, %v24
  %51 = vrot.lane.b32.xlu0 %v23, 17
  %v52 = vpop.permute.xlu0 %51
  %53 = vrot.lane.b32.xlu0 %v47, 17
  %v54 = vpop.permute.xlu0 %53
  %55 = vrot.lane.b32.xlu0 %v24, 17
  %v56 = vpop.permute.xlu0 %55
  %57 = vrot.lane.b32.xlu0 %v48, 17
  %v58 = vpop.permute.xlu0 %57
  %v59 = vlaneseq
  %v60 = vand.u32 %v59, 127
  %vm61 = vcmp.lt.s32.totalorder %v60, 17
  %v62 = vsel %vm61, %v56, %v58
  %v63 = vsel %vm61, %v54, %v56
  %v64 = vsel %vm61, %v52, %v54
  %v65 = vsel %vm61, %v58, %v52
  %66 = vrot.lane.b32.xlu0 %v23, 16
  %v67 = vpop.permute.xlu0 %66
  %68 = vrot.lane.b32.xlu0 %v47, 16
  %v69 = vpop.permute.xlu0 %68
  %70 = vrot.lane.b32.xlu0 %v24, 16
  %v71 = vpop.permute.xlu0 %70
  %72 = vrot.lane.b32.xlu0 %v48, 16
  %v73 = vpop.permute.xlu0 %72
  %vm74 = vcmp.lt.s32.totalorder %v60, 16
  %v75 = vsel %vm74, %v71, %v73
  %v76 = vsel %vm74, %v69, %v71
  %v77 = vsel %vm74, %v67, %v69
  %v78 = vsel %vm74, %v73, %v67
  %79 = vrot.lane.b32.xlu0 %v23, 15
  %v80 = vpop.permute.xlu0 %79
  %81 = vrot.lane.b32.xlu0 %v47, 15
  %v82 = vpop.permute.xlu0 %81
  %83 = vrot.lane.b32.xlu0 %v24, 15
  %v84 = vpop.permute.xlu0 %83
  %85 = vrot.lane.b32.xlu0 %v48, 15
  %v86 = vpop.permute.xlu0 %85
  %vm87 = vcmp.lt.s32.totalorder %v60, 15
  %v88 = vsel %vm87, %v84, %v86
  %v89 = vsel %vm87, %v82, %v84
  %v90 = vsel %vm87, %v80, %v82
  %v91 = vsel %vm87, %v86, %v80
  %92 = vrot.lane.b32.xlu0 %v23, 1
  %v93 = vpop.permute.xlu0 %92
  %94 = vrot.lane.b32.xlu0 %v47, 1
  %v95 = vpop.permute.xlu0 %94
  %96 = vrot.lane.b32.xlu0 %v24, 1
  %v97 = vpop.permute.xlu0 %96
  %98 = vrot.lane.b32.xlu0 %v48, 1
  %v99 = vpop.permute.xlu0 %98
  %vm100 = vcmp.lt.s32.totalorder %v60, 1
  %v101 = vsel %vm100, %v97, %v99
  %v102 = vsel %vm100, %v95, %v97
  %v103 = vsel %vm100, %v93, %v95
  %v104 = vsel %vm100, %v99, %v93
  %105 = vrot.lane.b32.xlu0 %v23, 127
  %v106 = vpop.permute.xlu0 %105
  %107 = vrot.lane.b32.xlu0 %v47, 127
  %v108 = vpop.permute.xlu0 %107
  %109 = vrot.lane.b32.xlu0 %v24, 127
  %v110 = vpop.permute.xlu0 %109
  %111 = vrot.lane.b32.xlu0 %v48, 127
  %v112 = vpop.permute.xlu0 %111
  %vm113 = vcmp.lt.s32.totalorder %v60, 127
  %v114 = vsel %vm113, %v110, %v112
  %v115 = vsel %vm113, %v108, %v110
  %v116 = vsel %vm113, %v106, %v108
  %v117 = vsel %vm113, %v112, %v106
  %118 = vrot.lane.b32.xlu0 %v23, 113
  %v119 = vpop.permute.xlu0 %118
  %120 = vrot.lane.b32.xlu0 %v47, 113
  %v121 = vpop.permute.xlu0 %120
  %122 = vrot.lane.b32.xlu0 %v24, 113
  %v123 = vpop.permute.xlu0 %122
  %124 = vrot.lane.b32.xlu0 %v48, 113
  %v125 = vpop.permute.xlu0 %124
  %vm126 = vcmp.lt.s32.totalorder %v60, 113
  %v127 = vsel %vm126, %v123, %v125
  %v128 = vsel %vm126, %v121, %v123
  %v129 = vsel %vm126, %v119, %v121
  %v130 = vsel %vm126, %v125, %v119
  %131 = vrot.lane.b32.xlu0 %v23, 112
  %v132 = vpop.permute.xlu0 %131
  %133 = vrot.lane.b32.xlu0 %v47, 112
  %v134 = vpop.permute.xlu0 %133
  %135 = vrot.lane.b32.xlu0 %v24, 112
  %v136 = vpop.permute.xlu0 %135
  %137 = vrot.lane.b32.xlu0 %v48, 112
  %v138 = vpop.permute.xlu0 %137
  %vm139 = vcmp.lt.s32.totalorder %v60, 112
  %v140 = vsel %vm139, %v136, %v138
  %v141 = vsel %vm139, %v134, %v136
  %v142 = vsel %vm139, %v132, %v134
  %v143 = vsel %vm139, %v138, %v132
  %144 = vrot.lane.b32.xlu0 %v23, 111
  %v145 = vpop.permute.xlu0 %144
  %146 = vrot.lane.b32.xlu0 %v47, 111
  %v147 = vpop.permute.xlu0 %146
  %148 = vrot.lane.b32.xlu0 %v24, 111
  %v149 = vpop.permute.xlu0 %148
  %150 = vrot.lane.b32.xlu0 %v48, 111
  %v151 = vpop.permute.xlu0 %150
  %vm152 = vcmp.lt.s32.totalorder %v60, 111
  %v153 = vsel %vm152, %v149, %v151
  %v154 = vsel %vm152, %v147, %v149
  %v155 = vsel %vm152, %v145, %v147
  %v156 = vsel %vm152, %v151, %v145
  %v161 = vrot.slane %v78, 4
  %v162 = vrot.slane %v77, 4
  %v163 = vrot.slane %v76, 4
  %v164 = vrot.slane %v75, 4
  %v173 = vrot.slane %v104, 4
  %v174 = vrot.slane %v103, 4
  %v175 = vrot.slane %v102, 4
  %v176 = vrot.slane %v101, 4
  %v185 = vrot.slane %v116, 4
  %v186 = vrot.slane %v115, 4
  %v187 = vrot.slane %v114, 4
  %v188 = vrot.slane %v117, 4
  %v197 = vrot.slane %v142, 4
  %v198 = vrot.slane %v141, 4
  %v199 = vrot.slane %v140, 4
  %v200 = vrot.slane %v143, 4
  %vm205 = vcmask 1043456
  %v206 = vsel %vm205, %v65, %v161
  %v207 = vsel %vm205, %v64, %v162
  %v208 = vsel %vm205, %v63, %v163
  %v209 = vsel %vm205, %v62, %v164
  %v210 = vsel %vm205, %v91, %v173
  %v211 = vsel %vm205, %v90, %v174
  %v212 = vsel %vm205, %v89, %v175
  %v213 = vsel %vm205, %v88, %v176
  %v214 = vsel %vm205, %v23, %v185
  %v215 = vsel %vm205, %v47, %v186
  %v216 = vsel %vm205, %v24, %v187
  %v217 = vsel %vm205, %v48, %v188
  %v218 = vsel %vm205, %v129, %v197
  %v219 = vsel %vm205, %v128, %v198
  %v220 = vsel %vm205, %v127, %v199
  %v221 = vsel %vm205, %v130, %v200
  %v222 = vmul.f32 %v206, %v25
  %v223 = vmul.f32 %v207, %v26
  %v224 = vmul.f32 %v208, %v27
  %v225 = vmul.f32 %v209, %v28
  %v226 = vmul.f32 %v210, %v29
  %v227 = vmul.f32 %v211, %v30
  %v228 = vmul.f32 %v212, %v31
  %v229 = vmul.f32 %v213, %v32
  %v230 = vmul.f32 %v214, %v33
  %v231 = vmul.f32 %v215, %v34
  %v232 = vmul.f32 %v216, %v35
  %v233 = vmul.f32 %v217, %v36
  %v234 = vmul.f32 %v218, %v37
  %v235 = vmul.f32 %v219, %v38
  %v236 = vmul.f32 %v220, %v39
  %v237 = vmul.f32 %v221, %v40
  %v238 = vmul.f32 %v155, %v41
  %v239 = vmul.f32 %v154, %v42
  %v240 = vmul.f32 %v153, %v43
  %v241 = vmul.f32 %v156, %v44
  %v242 = vld [vmem:[%s1] sm:$0xf]
  %v243 = vld [vmem:[%s2] sm:$0xf]
  %245 = vset.pattern.permute.xlu0 0
  %246 = vperm.xlu0 %245, %v243
  %v247 = vpop.permute.xlu0 %246
  %vm249 = vcmask 293888
  %v251 = vsel %vm249, %v242, 0
  %v254 = vsel %vm205, %v238, 0
  %v257 = vsel %vm205, %v239, 0
  %v260 = vsel %vm205, %v240, 0
  %v263 = vsel %vm205, %v241, 0
  %265 = vmatprep.subr.mxu0 0.0
  %266 = vmatpush1.msra.mxu0 0.0
  %267 = vmatprep.subr.mxu0 0.0
  %268 = vmatpush1.msra.mxu0 0.0
  %269 = vmatprep.subr.mxu0 0.0
  %270 = vmatpush1.msra.mxu0 0.0
  %271 = vmatprep.subr.mxu0 0.0
  %272 = vmatpush1.msra.mxu0 0.0
  %273 = vmatprep.subr.mxu0 0.0
  %274 = vmatpush1.msra.mxu0 0.0
  %275 = vmatprep.subr.mxu0 0.0
  %276 = vmatpush1.msra.mxu0 0.0
  %277 = vmatprep.subr.mxu0 0.0
  %278 = vmatpush1.msra.mxu0 0.0
  %279 = vmatprep.subr.mxu0 0.0
  %280 = vmatpush1.msra.mxu0 0.0
  %281 = vmatprep.subr.mxu0 0.0
  %282 = vmatpush1.msra.mxu0 0.0
  %283 = vmatprep.subr.mxu0 0.0
  %284 = vmatpush1.msra.mxu0 0.0
  %285 = vmatprep.subr.mxu0 0.0
  %286 = vmatpush1.msra.mxu0 0.0
  %287 = vmatprep.subr.mxu0 %v257
  %288 = vmatpush1.msra.mxu0 %v254
  %289 = vmatprep.subr.mxu0 %v235
  %290 = vmatpush1.msra.mxu0 %v234
  %291 = vmatprep.subr.mxu0 %v231
  %292 = vmatpush1.msra.mxu0 %v230
  %293 = vmatprep.subr.mxu0 %v227
  %294 = vmatpush1.msra.mxu0 %v226
  %295 = vmatprep.subr.mxu0 %v223
  %296 = vmatpush1.msra.mxu0 %v222
  %297 = vmatprep.subr.mxu0 0.0
  %298 = vmatpush2.msra.mxu0 0.0
  %299 = vmatprep.subr.mxu0 0.0
  %300 = vmatpush2.msra.mxu0 0.0
  %301 = vmatprep.subr.mxu0 0.0
  %302 = vmatpush2.msra.mxu0 0.0
  %303 = vmatprep.subr.mxu0 0.0
  %304 = vmatpush2.msra.mxu0 0.0
  %305 = vmatprep.subr.mxu0 0.0
  %306 = vmatpush2.msra.mxu0 0.0
  %307 = vmatprep.subr.mxu0 0.0
  %308 = vmatpush2.msra.mxu0 0.0
  %309 = vmatprep.subr.mxu0 0.0
  %310 = vmatpush2.msra.mxu0 0.0
  %311 = vmatprep.subr.mxu0 0.0
  %312 = vmatpush2.msra.mxu0 0.0
  %313 = vmatprep.subr.mxu0 0.0
  %314 = vmatpush2.msra.mxu0 0.0
  %315 = vmatprep.subr.mxu0 0.0
  %316 = vmatpush2.msra.mxu0 0.0
  %317 = vmatprep.subr.mxu0 0.0
  %318 = vmatpush2.msra.mxu0 0.0
  %319 = vmatprep.subr.mxu0 0.0
  %320 = vmatpush2.msra.mxu0 0.0
  %321 = vmatprep.subr.mxu0 0.0
  %322 = vmatpush2.msra.mxu0 0.0
  %323 = vmatprep.subr.mxu0 0.0
  %324 = vmatpush2.msra.mxu0 0.0
  %325 = vmatprep.subr.mxu0 0.0
  %326 = vmatpush2.msra.mxu0 0.0
  %327 = vmatprep.subr.mxu0 0.0
  %328 = vmatpush2.msra.mxu0 0.0
  %329 = vmatprep.mubr.f32.mxu0 0.0
  %330 = vmatmul.mubr.f32.gmra.mxu0 %v251
  %v331 = vpop.f32.mrf.mxu0
  %v332 = vadd.f32 %v247, %v331
  %v333 = vpop.f32.mrf.mxu0
  %v334 = vadd.f32 %v247, %v333
  %335 = vdwg.mxu0
  %336 = vmatprep.subr.mxu0 0.0
  %337 = vmatpush1.msra.mxu0 0.0
  %338 = vmatprep.subr.mxu0 0.0
  %339 = vmatpush1.msra.mxu0 0.0
  %340 = vmatprep.subr.mxu0 0.0
  %341 = vmatpush1.msra.mxu0 0.0
  %342 = vmatprep.subr.mxu0 0.0
  %343 = vmatpush1.msra.mxu0 0.0
  %344 = vmatprep.subr.mxu0 0.0
  %345 = vmatpush1.msra.mxu0 0.0
  %346 = vmatprep.subr.mxu0 0.0
  %347 = vmatpush1.msra.mxu0 0.0
  %348 = vmatprep.subr.mxu0 0.0
  %349 = vmatpush1.msra.mxu0 0.0
  %350 = vmatprep.subr.mxu0 0.0
  %351 = vmatpush1.msra.mxu0 0.0
  %352 = vmatprep.subr.mxu0 0.0
  %353 = vmatpush1.msra.mxu0 0.0
  %354 = vmatprep.subr.mxu0 0.0
  %355 = vmatpush1.msra.mxu0 0.0
  %356 = vmatprep.subr.mxu0 0.0
  %357 = vmatpush1.msra.mxu0 0.0
  %358 = vmatprep.subr.mxu0 %v263
  %359 = vmatpush1.msra.mxu0 %v260
  %360 = vmatprep.subr.mxu0 %v237
  %361 = vmatpush1.msra.mxu0 %v236
  %362 = vmatprep.subr.mxu0 %v233
  %363 = vmatpush1.msra.mxu0 %v232
  %364 = vmatprep.subr.mxu0 %v229
  %365 = vmatpush1.msra.mxu0 %v228
  %366 = vmatprep.subr.mxu0 %v225
  %367 = vmatpush1.msra.mxu0 %v224
  %368 = vmatprep.subr.mxu0 0.0
  %369 = vmatpush2.msra.mxu0 0.0
  %370 = vmatprep.subr.mxu0 0.0
  %371 = vmatpush2.msra.mxu0 0.0
  %372 = vmatprep.subr.mxu0 0.0
  %373 = vmatpush2.msra.mxu0 0.0
  %374 = vmatprep.subr.mxu0 0.0
  %375 = vmatpush2.msra.mxu0 0.0
  %376 = vmatprep.subr.mxu0 0.0
  %377 = vmatpush2.msra.mxu0 0.0
  %378 = vmatprep.subr.mxu0 0.0
  %379 = vmatpush2.msra.mxu0 0.0
  %380 = vmatprep.subr.mxu0 0.0
  %381 = vmatpush2.msra.mxu0 0.0
  %382 = vmatprep.subr.mxu0 0.0
  %383 = vmatpush2.msra.mxu0 0.0
  %384 = vmatprep.subr.mxu0 0.0
  %385 = vmatpush2.msra.mxu0 0.0
  %386 = vmatprep.subr.mxu0 0.0
  %387 = vmatpush2.msra.mxu0 0.0
  %388 = vmatprep.subr.mxu0 0.0
  %389 = vmatpush2.msra.mxu0 0.0
  %390 = vmatprep.subr.mxu0 0.0
  %391 = vmatpush2.msra.mxu0 0.0
  %392 = vmatprep.subr.mxu0 0.0
  %393 = vmatpush2.msra.mxu0 0.0
  %394 = vmatprep.subr.mxu0 0.0
  %395 = vmatpush2.msra.mxu0 0.0
  %396 = vmatprep.subr.mxu0 0.0
  %397 = vmatpush2.msra.mxu0 0.0
  %398 = vmatprep.subr.mxu0 0.0
  %399 = vmatpush2.msra.mxu0 0.0
  %400 = vmatprep.mubr.f32.mxu0 0.0
  %401 = vmatmul.mubr.f32.gmra.mxu0 %v251
  %v402 = vpop.f32.mrf.mxu0
  %v403 = vadd.f32 %v247, %v402
  %v404 = vpop.f32.mrf.mxu0
  %v405 = vadd.f32 %v247, %v404
  %406 = vdwg.mxu0
  %v407 = vmax.f32 %v332, 0.0
  %v408 = vmax.f32 %v334, 0.0
  %v409 = vmax.f32 %v403, 0.0
  %v410 = vmax.f32 %v405, 0.0
  %411 = vrot.lane.b32.xlu0 %v407, 17
  %v412 = vpop.permute.xlu0 %411
  %413 = vrot.lane.b32.xlu0 %v408, 17
  %v414 = vpop.permute.xlu0 %413
  %415 = vrot.lane.b32.xlu0 %v409, 17
  %v416 = vpop.permute.xlu0 %415
  %417 = vrot.lane.b32.xlu0 %v410, 17
  %v418 = vpop.permute.xlu0 %417
  %v419 = vsel %vm61, %v416, %v418
  %v420 = vsel %vm61, %v414, %v416
  %v421 = vsel %vm61, %v412, %v414
  %v422 = vsel %vm61, %v418, %v412
  %423 = vrot.lane.b32.xlu0 %v407, 16
  %v424 = vpop.permute.xlu0 %423
  %425 = vrot.lane.b32.xlu0 %v408, 16
  %v426 = vpop.permute.xlu0 %425
  %427 = vrot.lane.b32.xlu0 %v409, 16
  %v428 = vpop.permute.xlu0 %427
  %429 = vrot.lane.b32.xlu0 %v410, 16
  %v430 = vpop.permute.xlu0 %429
  %v431 = vsel %vm74, %v428, %v430
  %v432 = vsel %vm74, %v426, %v428
  %v433 = vsel %vm74, %v424, %v426
  %v434 = vsel %vm74, %v430, %v424
  %435 = vrot.lane.b32.xlu0 %v407, 15
  %v436 = vpop.permute.xlu0 %435
  %437 = vrot.lane.b32.xlu0 %v408, 15
  %v438 = vpop.permute.xlu0 %437
  %439 = vrot.lane.b32.xlu0 %v409, 15
  %v440 = vpop.permute.xlu0 %439
  %441 = vrot.lane.b32.xlu0 %v410, 15
  %v442 = vpop.permute.xlu0 %441
  %v443 = vsel %vm87, %v440, %v442
  %v444 = vsel %vm87, %v438, %v440
  %v445 = vsel %vm87, %v436, %v438
  %v446 = vsel %vm87, %v442, %v436
  %447 = vrot.lane.b32.xlu0 %v407, 1
  %v448 = vpop.permute.xlu0 %447
  %449 = vrot.lane.b32.xlu0 %v408, 1
  %v450 = vpop.permute.xlu0 %449
  %451 = vrot.lane.b32.xlu0 %v409, 1
  %v452 = vpop.permute.xlu0 %451
  %453 = vrot.lane.b32.xlu0 %v410, 1
  %v454 = vpop.permute.xlu0 %453
  %v455 = vsel %vm100, %v452, %v454
  %v456 = vsel %vm100, %v450, %v452
  %v457 = vsel %vm100, %v448, %v450
  %v458 = vsel %vm100, %v454, %v448
  %459 = vrot.lane.b32.xlu0 %v407, 127
  %v460 = vpop.permute.xlu0 %459
  %461 = vrot.lane.b32.xlu0 %v408, 127
  %v462 = vpop.permute.xlu0 %461
  %463 = vrot.lane.b32.xlu0 %v409, 127
  %v464 = vpop.permute.xlu0 %463
  %465 = vrot.lane.b32.xlu0 %v410, 127
  %v466 = vpop.permute.xlu0 %465
  %v467 = vsel %vm113, %v464, %v466
  %v468 = vsel %vm113, %v462, %v464
  %v469 = vsel %vm113, %v460, %v462
  %v470 = vsel %vm113, %v466, %v460
  %471 = vrot.lane.b32.xlu0 %v407, 113
  %v472 = vpop.permute.xlu0 %471
  %473 = vrot.lane.b32.xlu0 %v408, 113
  %v474 = vpop.permute.xlu0 %473
  %475 = vrot.lane.b32.xlu0 %v409, 113
  %v476 = vpop.permute.xlu0 %475
  %477 = vrot.lane.b32.xlu0 %v410, 113
  %v478 = vpop.permute.xlu0 %477
  %v479 = vsel %vm126, %v476, %v478
  %v480 = vsel %vm126, %v474, %v476
  %v481 = vsel %vm126, %v472, %v474
  %v482 = vsel %vm126, %v478, %v472
  %483 = vrot.lane.b32.xlu0 %v407, 112
  %v484 = vpop.permute.xlu0 %483
  %485 = vrot.lane.b32.xlu0 %v408, 112
  %v486 = vpop.permute.xlu0 %485
  %487 = vrot.lane.b32.xlu0 %v409, 112
  %v488 = vpop.permute.xlu0 %487
  %489 = vrot.lane.b32.xlu0 %v410, 112
  %v490 = vpop.permute.xlu0 %489
  %v491 = vsel %vm139, %v488, %v490
  %v492 = vsel %vm139, %v486, %v488
  %v493 = vsel %vm139, %v484, %v486
  %v494 = vsel %vm139, %v490, %v484
  %495 = vrot.lane.b32.xlu0 %v407, 111
  %v496 = vpop.permute.xlu0 %495
  %497 = vrot.lane.b32.xlu0 %v408, 111
  %v498 = vpop.permute.xlu0 %497
  %499 = vrot.lane.b32.xlu0 %v409, 111
  %v500 = vpop.permute.xlu0 %499
  %501 = vrot.lane.b32.xlu0 %v410, 111
  %v502 = vpop.permute.xlu0 %501
  %v503 = vsel %vm152, %v500, %v502
  %v504 = vsel %vm152, %v498, %v500
  %v505 = vsel %vm152, %v496, %v498
  %v506 = vsel %vm152, %v502, %v496
  %v511 = vrot.slane %v434, 4
  %v512 = vrot.slane %v433, 4
  %v513 = vrot.slane %v432, 4
  %v514 = vrot.slane %v431, 4
  %v523 = vrot.slane %v458, 4
  %v524 = vrot.slane %v457, 4
  %v525 = vrot.slane %v456, 4
  %v526 = vrot.slane %v455, 4
  %v535 = vrot.slane %v469, 4
  %v536 = vrot.slane %v468, 4
  %v537 = vrot.slane %v467, 4
  %v538 = vrot.slane %v470, 4
  %v547 = vrot.slane %v493, 4
  %v548 = vrot.slane %v492, 4
  %v549 = vrot.slane %v491, 4
  %v550 = vrot.slane %v494, 4
  %v555 = vsel %vm205, %v422, %v511
  %v556 = vsel %vm205, %v421, %v512
  %v557 = vsel %vm205, %v420, %v513
  %v558 = vsel %vm205, %v419, %v514
  %v559 = vsel %vm205, %v446, %v523
  %v560 = vsel %vm205, %v445, %v524
  %v561 = vsel %vm205, %v444, %v525
  %v562 = vsel %vm205, %v443, %v526
  %v563 = vsel %vm205, %v407, %v535
  %v564 = vsel %vm205, %v408, %v536
  %v565 = vsel %vm205, %v409, %v537
  %v566 = vsel %vm205, %v410, %v538
  %v567 = vsel %vm205, %v481, %v547
  %v568 = vsel %vm205, %v480, %v548
  %v569 = vsel %vm205, %v479, %v549
  %v570 = vsel %vm205, %v482, %v550
  %v571 = vmul.f32 %v555, %v25
  %v572 = vmul.f32 %v556, %v26
  %v573 = vmul.f32 %v557, %v27
  %v574 = vmul.f32 %v558, %v28
  %v575 = vmul.f32 %v559, %v29
  %v576 = vmul.f32 %v560, %v30
  %v577 = vmul.f32 %v561, %v31
  %v578 = vmul.f32 %v562, %v32
  %v579 = vmul.f32 %v563, %v33
  %v580 = vmul.f32 %v564, %v34
  %v581 = vmul.f32 %v565, %v35
  %v582 = vmul.f32 %v566, %v36
  %v583 = vmul.f32 %v567, %v37
  %v584 = vmul.f32 %v568, %v38
  %v585 = vmul.f32 %v569, %v39
  %v586 = vmul.f32 %v570, %v40
  %v587 = vmul.f32 %v505, %v41
  %v588 = vmul.f32 %v504, %v42
  %v589 = vmul.f32 %v503, %v43
  %v590 = vmul.f32 %v506, %v44
  %v591 = vld [vmem:[%s3] sm:$0xf]
  %v592 = vld [vmem:[%s4] sm:$0xf]
  %594 = vset.pattern.permute.xlu0 0
  %595 = vperm.xlu0 %594, %v592
  %v596 = vpop.permute.xlu0 %595
  %v599 = vsel %vm249, %v591, 0
  %v602 = vsel %vm205, %v587, 0
  %v605 = vsel %vm205, %v588, 0
  %v608 = vsel %vm205, %v589, 0
  %v611 = vsel %vm205, %v590, 0
  %613 = vmatprep.subr.mxu0 0.0
  %614 = vmatpush1.msra.mxu0 0.0
  %615 = vmatprep.subr.mxu0 0.0
  %616 = vmatpush1.msra.mxu0 0.0
  %617 = vmatprep.subr.mxu0 0.0
  %618 = vmatpush1.msra.mxu0 0.0
  %619 = vmatprep.subr.mxu0 0.0
  %620 = vmatpush1.msra.mxu0 0.0
  %621 = vmatprep.subr.mxu0 0.0
  %622 = vmatpush1.msra.mxu0 0.0
  %623 = vmatprep.subr.mxu0 0.0
  %624 = vmatpush1.msra.mxu0 0.0
  %625 = vmatprep.subr.mxu0 0.0
  %626 = vmatpush1.msra.mxu0 0.0
  %627 = vmatprep.subr.mxu0 0.0
  %628 = vmatpush1.msra.mxu0 0.0
  %629 = vmatprep.subr.mxu0 0.0
  %630 = vmatpush1.msra.mxu0 0.0
  %631 = vmatprep.subr.mxu0 0.0
  %632 = vmatpush1.msra.mxu0 0.0
  %633 = vmatprep.subr.mxu0 0.0
  %634 = vmatpush1.msra.mxu0 0.0
  %635 = vmatprep.subr.mxu0 %v605
  %636 = vmatpush1.msra.mxu0 %v602
  %637 = vmatprep.subr.mxu0 %v584
  %638 = vmatpush1.msra.mxu0 %v583
  %639 = vmatprep.subr.mxu0 %v580
  %640 = vmatpush1.msra.mxu0 %v579
  %641 = vmatprep.subr.mxu0 %v576
  %642 = vmatpush1.msra.mxu0 %v575
  %643 = vmatprep.subr.mxu0 %v572
  %644 = vmatpush1.msra.mxu0 %v571
  %645 = vmatprep.subr.mxu0 0.0
  %646 = vmatpush2.msra.mxu0 0.0
  %647 = vmatprep.subr.mxu0 0.0
  %648 = vmatpush2.msra.mxu0 0.0
  %649 = vmatprep.subr.mxu0 0.0
  %650 = vmatpush2.msra.mxu0 0.0
  %651 = vmatprep.subr.mxu0 0.0
  %652 = vmatpush2.msra.mxu0 0.0
  %653 = vmatprep.subr.mxu0 0.0
  %654 = vmatpush2.msra.mxu0 0.0
  %655 = vmatprep.subr.mxu0 0.0
  %656 = vmatpush2.msra.mxu0 0.0
  %657 = vmatprep.subr.mxu0 0.0
  %658 = vmatpush2.msra.mxu0 0.0
  %659 = vmatprep.subr.mxu0 0.0
  %660 = vmatpush2.msra.mxu0 0.0
  %661 = vmatprep.subr.mxu0 0.0
  %662 = vmatpush2.msra.mxu0 0.0
  %663 = vmatprep.subr.mxu0 0.0
  %664 = vmatpush2.msra.mxu0 0.0
  %665 = vmatprep.subr.mxu0 0.0
  %666 = vmatpush2.msra.mxu0 0.0
  %667 = vmatprep.subr.mxu0 0.0
  %668 = vmatpush2.msra.mxu0 0.0
  %669 = vmatprep.subr.mxu0 0.0
  %670 = vmatpush2.msra.mxu0 0.0
  %671 = vmatprep.subr.mxu0 0.0
  %672 = vmatpush2.msra.mxu0 0.0
  %673 = vmatprep.subr.mxu0 0.0
  %674 = vmatpush2.msra.mxu0 0.0
  %675 = vmatprep.subr.mxu0 0.0
  %676 = vmatpush2.msra.mxu0 0.0
  %677 = vmatprep.mubr.f32.mxu0 0.0
  %678 = vmatmul.mubr.f32.gmra.mxu0 %v599
  %v679 = vpop.f32.mrf.mxu0
  %v680 = vadd.f32 %v596, %v679
  %v681 = vpop.f32.mrf.mxu0
  %v682 = vadd.f32 %v596, %v681
  %683 = vdwg.mxu0
  %684 = vmatprep.subr.mxu0 0.0
  %685 = vmatpush1.msra.mxu0 0.0
  %686 = vmatprep.subr.mxu0 0.0
  %687 = vmatpush1.msra.mxu0 0.0
  %688 = vmatprep.subr.mxu0 0.0
  %689 = vmatpush1.msra.mxu0 0.0
  %690 = vmatprep.subr.mxu0 0.0
  %691 = vmatpush1.msra.mxu0 0.0
  %692 = vmatprep.subr.mxu0 0.0
  %693 = vmatpush1.msra.mxu0 0.0
  %694 = vmatprep.subr.mxu0 0.0
  %695 = vmatpush1.msra.mxu0 0.0
  %696 = vmatprep.subr.mxu0 0.0
  %697 = vmatpush1.msra.mxu0 0.0
  %698 = vmatprep.subr.mxu0 0.0
  %699 = vmatpush1.msra.mxu0 0.0
  %700 = vmatprep.subr.mxu0 0.0
  %701 = vmatpush1.msra.mxu0 0.0
  %702 = vmatprep.subr.mxu0 0.0
  %703 = vmatpush1.msra.mxu0 0.0
  %704 = vmatprep.subr.mxu0 0.0
  %705 = vmatpush1.msra.mxu0 0.0
  %706 = vmatprep.subr.mxu0 %v611
  %707 = vmatpush1.msra.mxu0 %v608
  %708 = vmatprep.subr.mxu0 %v586
  %709 = vmatpush1.msra.mxu0 %v585
  %710 = vmatprep.subr.mxu0 %v582
  %711 = vmatpush1.msra.mxu0 %v581
  %712 = vmatprep.subr.mxu0 %v578
  %713 = vmatpush1.msra.mxu0 %v577
  %714 = vmatprep.subr.mxu0 %v574
  %715 = vmatpush1.msra.mxu0 %v573
  %716 = vmatprep.subr.mxu0 0.0
  %717 = vmatpush2.msra.mxu0 0.0
  %718 = vmatprep.subr.mxu0 0.0
  %719 = vmatpush2.msra.mxu0 0.0
  %720 = vmatprep.subr.mxu0 0.0
  %721 = vmatpush2.msra.mxu0 0.0
  %722 = vmatprep.subr.mxu0 0.0
  %723 = vmatpush2.msra.mxu0 0.0
  %724 = vmatprep.subr.mxu0 0.0
  %725 = vmatpush2.msra.mxu0 0.0
  %726 = vmatprep.subr.mxu0 0.0
  %727 = vmatpush2.msra.mxu0 0.0
  %728 = vmatprep.subr.mxu0 0.0
  %729 = vmatpush2.msra.mxu0 0.0
  %730 = vmatprep.subr.mxu0 0.0
  %731 = vmatpush2.msra.mxu0 0.0
  %732 = vmatprep.subr.mxu0 0.0
  %733 = vmatpush2.msra.mxu0 0.0
  %734 = vmatprep.subr.mxu0 0.0
  %735 = vmatpush2.msra.mxu0 0.0
  %736 = vmatprep.subr.mxu0 0.0
  %737 = vmatpush2.msra.mxu0 0.0
  %738 = vmatprep.subr.mxu0 0.0
  %739 = vmatpush2.msra.mxu0 0.0
  %740 = vmatprep.subr.mxu0 0.0
  %741 = vmatpush2.msra.mxu0 0.0
  %742 = vmatprep.subr.mxu0 0.0
  %743 = vmatpush2.msra.mxu0 0.0
  %744 = vmatprep.subr.mxu0 0.0
  %745 = vmatpush2.msra.mxu0 0.0
  %746 = vmatprep.subr.mxu0 0.0
  %747 = vmatpush2.msra.mxu0 0.0
  %748 = vmatprep.mubr.f32.mxu0 0.0
  %749 = vmatmul.mubr.f32.gmra.mxu0 %v599
  %v750 = vpop.f32.mrf.mxu0
  %v751 = vadd.f32 %v596, %v750
  %v752 = vpop.f32.mrf.mxu0
  %v753 = vadd.f32 %v596, %v752
  %754 = vdwg.mxu0
  %v755 = vadd.f32 %v680, %v23
  %v756 = vadd.f32 %v682, %v47
  %v757 = vadd.f32 %v751, %v24
  %v758 = vadd.f32 %v753, %v48
  %v759 = vmax.f32 %v755, 0.0
  %v760 = vmax.f32 %v756, 0.0
  %v761 = vmax.f32 %v757, 0.0
  %v762 = vmax.f32 %v758, 0.0
  %v767 = vcombine.low %v759, %v760
  %v768 = vcombine.low %v761, %v762
  %771 = vst [vmem:[%s6] sm:$0xff] %v767
  %772 = vst [vmem:[%s6 + $0x8] sm:$0xff] %v768
  // Predicated region
  $region26: #{basic_block_forward.1} parent=0 // pred_check
    _
  $region27: #{basic_block_forward.1} parent=0 // pred_check_branch
    %774 = sbr.rel (0) target = $region29
  $region28: #{basic_block_forward.1} parent=0 // pred_region
    _
  $region29: #{basic_block_forward.1} parent=0 // pred_fallthru
    _
  // Predicated region
  $region30: #{basic_block_forward.1} parent=0 // pred_check
    _
  $region31: #{basic_block_forward.1} parent=0 // pred_check_branch
    %776 = sbr.rel (0) target = $region33
  $region32: #{basic_block_forward.1} parent=0 // pred_region
    _
  $region33: #{basic_block_forward.1} parent=0 // pred_fallthru
    _

</llo_original>
